<compile_context>
chip_gen: v6e
topology: v6e:2x2x1
jax: 0.10.0
libtpu: 0.0.40
codegen_flags: <defaults>
</compile_context>

<pallas_src>
import functools
import math

import jax
import jax.numpy as jnp
from jax.experimental import pallas as pl
from jax.experimental.pallas import tpu as pltpu


HPAD = 128                      # hidden width zero-padded to a full lane tile (32 -> 128)
TM_MAX = 2048                   # max rows per grid step (mem-bound: big tiles amortize ~0.35us/step)
TM_SPLIT = 512                  # above this many rows, keep >=2 grid steps (v7x 2nd TC via "parallel")
VMEM_LIMIT = 48 * 1024 * 1024   # <= v7x 64 MiB/TC; far below v5e/v6e 128 MiB


def _round_up(x, m):
    return (x + m - 1) // m * m


def _pick_tm(R):
    """Row-tile size: as large as possible (per-step overhead dominates this
    mem-bound kernel), but keep >=2 grid steps once there is enough work so the
    'parallel' row axis can be sharded across TensorCores (v7x megacore)."""
    if R <= TM_SPLIT:
        return _round_up(R, 8)
    return min(TM_MAX, _round_up((R + 1) // 2, 8))


# ------------------------------ fused Pallas kernel ------------------------------

def _fused_disc_kernel(*refs, num_hidden, fcol):
    """Whole Discriminator forward for one row tile.

    refs = (x, W0, b0, [Wh_i, Wx_i, b_i] * (num_hidden-1), wfh, out)
    Weights are pre-folded (BN), pre-transposed to (in, out), zero-padded to
    HPAD lanes and cast to bf16 at prep time; biases & wfh stay f32.  The final
    Linear's x-part + bias already sit in column `fcol` of the last layer's
    weight/bias (read pre-activation).
    """
    x_ref = refs[0]
    o_ref = refs[-1]
    prm = refs[1:-1]

    x = x_ref[...]                        # (TM, K) bf16, streamed from HBM in bf16

    # layer 0: Linear + folded BN + LeakyReLU(0.2)
    # TODO(synk): Dropout(0.5) / training-mode BN are stochastic; eval semantics used.
    w0, b0 = prm[0], prm[1]
    z = jnp.dot(x, w0[...], preferred_element_type=jnp.float32) + b0[...]
    # LeakyReLU computed in f32 (v5e has no bf16 VPU), stored as bf16 (next MXU operand)
    h = jnp.maximum(z, 0.2 * z).astype(jnp.bfloat16)

    # hidden layers on concat([h, x]):  h @ Wh + x @ Wx + b
    p = 2
    for _ in range(num_hidden - 1):
        wh, wx, b = prm[p], prm[p + 1], prm[p + 2]
        p += 3
        z = jnp.dot(h, wh[...], preferred_element_type=jnp.float32)
        z = z + jnp.dot(x, wx[...], preferred_element_type=jnp.float32)
        z = z + b[...]
        h = jnp.maximum(z, 0.2 * z).astype(jnp.bfloat16)

    # final Linear(dim, 1) + Sigmoid.
    # x·wfd + bf was folded into column `fcol` of the last layer's z (pre-activation);
    # only the h·wfh lane reduce remains (wfh is zero at column fcol).
    wfh = prm[p]
    zf = jnp.sum(h * wfh[...], axis=-1, keepdims=True) + z[:, fcol:fcol + 1]   # (TM, 1) f32

    # numerically stable sigmoid; reciprocal goes to the (otherwise idle) EUP slot.
    # approx=True adds a tiny relative error, well inside the bf16 MXU error budget.
    ez = jnp.exp(-jnp.abs(zf))
    num = jnp.where(zf >= 0.0, 1.0, ez)
    sig = num * pl.reciprocal(1.0 + ez, approx=True)
    o_ref[...] = jnp.clip(sig, 0.0, 1.0).astype(o_ref.dtype)


def _fused_forward(x, prepped, num_hidden, fcol, tm):
    R, K = x.shape
    n_tiles = R // tm

    row_spec = pl.BlockSpec((tm, K), lambda i: (i, 0))
    out_spec = pl.BlockSpec((tm, 1), lambda i: (i, 0))

    def resident(a):
        # whole array, same block index every step -> fetched once, stays in VMEM
        return pl.BlockSpec(a.shape, lambda i: (0, 0))

    in_specs = [row_spec] + [resident(a) for a in prepped]

    return pl.pallas_call(
        functools.partial(_fused_disc_kernel, num_hidden=num_hidden, fcol=fcol),
        out_shape=jax.ShapeDtypeStruct((R, 1), jnp.float32),
        grid=(n_tiles,),
        in_specs=in_specs,
        out_specs=out_spec,
        compiler_params=pltpu.CompilerParams(
            dimension_semantics=("parallel",),      # shard row tiles across TCs (v7x)
            vmem_limit_bytes=VMEM_LIMIT,
        ),
    )(x, *prepped)


# ------------------------- one-time parameter preparation -------------------------

def _fold_bn(W, b, gamma, beta, mean, var, eps=1e-5):
    # BatchNorm1d (eval, running stats) folded into the preceding Linear:
    #   bn(z) = z*s + t,  s = gamma/sqrt(var+eps),  t = beta - mean*s
    s = gamma / jnp.sqrt(var + eps)
    return W * s[:, None], b * s + beta - mean * s


def prepare_discriminator_params(params, final, data_pacdim, hpad=HPAD):
    """Fold BN, split concat([h,x]) weights, transpose to (in,out), zero-pad the
    hidden width to `hpad` lanes, fold the final Linear's x-part/bias into the
    last layer's spare output column, cast MXU operands to bf16.  Done once.
    Returns (prepped_list, fcol)."""
    Wf, bfin = final
    num_hidden = len(params)

    # layer 0
    p0 = params[0]
    w_eff, b_eff = _fold_bn(p0["W"], p0["b"], p0["gamma"], p0["beta"], p0["mean"], p0["var"])
    h0 = w_eff.shape[0]
    assert h0 + 1 <= hpad
    W0 = jnp.zeros((data_pacdim, hpad), jnp.float32).at[:, :h0].set(w_eff.T)
    B0 = jnp.zeros((1, hpad), jnp.float32).at[0, :h0].set(b_eff)
    if num_hidden == 1:
        # fold final Linear's x-part + bias into the spare column h0
        W0 = W0.at[:, h0].set(Wf[0, h0:].astype(jnp.float32))
        B0 = B0.at[0, h0].set(bfin[0])
    prepped = [W0.astype(jnp.bfloat16), B0]

    prev_h = h0
    for li, p in enumerate(params[1:], start=1):
        w_eff, b_eff = _fold_bn(p["W"], p["b"], p["gamma"], p["beta"], p["mean"], p["var"])
        h = w_eff.shape[0]
        assert h + 1 <= hpad
        Wh = jnp.zeros((hpad, hpad), jnp.float32).at[:prev_h, :h].set(w_eff[:, :prev_h].T)
        Wx = jnp.zeros((data_pacdim, hpad), jnp.float32).at[:, :h].set(w_eff[:, prev_h:].T)
        Bb = jnp.zeros((1, hpad), jnp.float32).at[0, :h].set(b_eff)
        if li == num_hidden - 1:
            # fold final Linear's x-part + bias into the spare column h of the last layer
            Wx = Wx.at[:, h].set(Wf[0, h:].astype(jnp.float32))
            Bb = Bb.at[0, h].set(bfin[0])
        prepped += [Wh.astype(jnp.bfloat16), Wx.astype(jnp.bfloat16), Bb]
        prev_h = h

    # h-part of the final Linear stays as a lane-reduce weight (f32, zero at col prev_h)
    wfh = jnp.zeros((1, hpad), jnp.float32).at[0, :prev_h].set(Wf[0, :prev_h])
    prepped.append(wfh)
    return prepped, prev_h


# ------------------------------------ forward ------------------------------------

def discriminator_forward(data, prepped, *, data_dim, pac, num_hidden, fcol):
    B = data.shape[0]
    assert B % pac == 0
    K = data_dim * pac
    # pack (PyTorch data.view(-1, data_dim*pac)) and stream x in bf16: halves
    # the dominant x HBM->VMEM traffic + its double buffer; under jit the cast
    # fuses with the producer of `data`.
    x = data.reshape(-1, K).astype(jnp.bfloat16)
    R = x.shape[0]

    tm = _pick_tm(R)
    Rpad = _round_up(R, tm)
    if Rpad != R:
        x = jnp.pad(x, ((0, Rpad - R), (0, 0)))

    out = _fused_forward(x, prepped, num_hidden, fcol, tm)
    return out[:R]                                   # (B//pac, 1)


# ------------------------------- reference & params -------------------------------

def init_discriminator_params(key, data_dim, discriminator_dim, pac):
    data_pacdim = data_dim * pac
    params = []
    dim = data_pacdim
    for h in discriminator_dim:
        key, k1, k2, k3, k4, k5, k6 = jax.random.split(key, 7)
        bound = 1.0 / math.sqrt(dim)
        params.append(dict(
            W=jax.random.uniform(k1, (h, dim), jnp.float32, -bound, bound),
            b=jax.random.uniform(k2, (h,), jnp.float32, -bound, bound),
            gamma=jax.random.uniform(k3, (h,), jnp.float32, 0.5, 1.5),
            beta=jax.random.uniform(k4, (h,), jnp.float32, -0.1, 0.1),
            mean=jax.random.uniform(k5, (h,), jnp.float32, -0.1, 0.1),
            var=jax.random.uniform(k6, (h,), jnp.float32, 0.5, 1.5),
        ))
        dim = h + data_pacdim
    key, k1, k2 = jax.random.split(key, 3)
    bound = 1.0 / math.sqrt(dim)
    Wf = jax.random.uniform(k1, (1, dim), jnp.float32, -bound, bound)
    bf = jax.random.uniform(k2, (1,), jnp.float32, -bound, bound)
    return params, (Wf, bf)


def reference_forward(data, params, final, data_dim, pac):
    x = data.reshape(-1, data_dim * pac).astype(jnp.float32)
    out = x
    for p in params:
        w_eff, b_eff = _fold_bn(p["W"], p["b"], p["gamma"], p["beta"], p["mean"], p["var"])
        z = out @ w_eff.T + b_eff
        h = jnp.maximum(z, 0.2 * z)
        out = jnp.concatenate([h, x], axis=1)
    Wf, bf = final
    return jax.nn.sigmoid(out @ Wf.T + bf)


# -------------------------------------- main --------------------------------------

if __name__ == "__main__":
    data_dim = 16
    discriminator_dim = (32, 32)
    pac = 10
    batch = 2 * pac            # B = 20 -> 20 % pac == 0

    key = jax.random.PRNGKey(0)
    k_data, k_params = jax.random.split(key)
    data = jax.random.normal(k_data, (batch, data_dim), jnp.float32)
    params, final = init_discriminator_params(k_params, data_dim, discriminator_dim, pac)

    prepped, fcol = prepare_discriminator_params(params, final, data_dim * pac)

    fwd = jax.jit(functools.partial(
        discriminator_forward, data_dim=data_dim, pac=pac,
        num_hidden=len(discriminator_dim), fcol=fcol))

    out = jax.block_until_ready(fwd(data, prepped))
    ref = jax.block_until_ready(reference_forward(data, params, final, data_dim, pac))

    assert out.shape == (batch // pac, 1)
    assert bool(jnp.all(jnp.isfinite(out)))
    assert bool(jnp.all((out >= 0.0) & (out <= 1.0)))
    assert float(jnp.max(jnp.abs(out - ref))) < 2e-2   # bf16 MXU path vs f32 reference
    print("KERNEL_OK")
</pallas_src>

<mosaic_0001>
module attributes {stable_mosaic.version = 11 : i64} {
  func.func @_fused_disc_kernel(%arg0: i32, %arg1: memref<8x160xbf16, #tpu.memory_space<vmem>>, %arg2: memref<160x128xbf16, #tpu.memory_space<vmem>>, %arg3: memref<1x128xf32, #tpu.memory_space<vmem>>, %arg4: memref<128x128xbf16, #tpu.memory_space<vmem>>, %arg5: memref<160x128xbf16, #tpu.memory_space<vmem>>, %arg6: memref<1x128xf32, #tpu.memory_space<vmem>>, %arg7: memref<1x128xf32, #tpu.memory_space<vmem>>, %arg8: memref<8x1xf32, #tpu.memory_space<vmem>>) attributes {dimension_semantics = [#tpu.dimension_semantics<parallel>], iteration_bounds = array<i64: 1>, scalar_prefetch = 0 : i64, scratch_operands = 0 : i64, tpu.core_type = #tpu.core_type<tc>, window_params = [{transform_indices = @transform_0, window_bounds = array<i64: 8, 160>}, {pipeline_mode = #tpu.pipeline_mode<synchronous>, transform_indices = @transform_1, window_bounds = array<i64: 160, 128>}, {pipeline_mode = #tpu.pipeline_mode<synchronous>, transform_indices = @transform_2, window_bounds = array<i64: 1, 128>}, {pipeline_mode = #tpu.pipeline_mode<synchronous>, transform_indices = @transform_3, window_bounds = array<i64: 128, 128>}, {pipeline_mode = #tpu.pipeline_mode<synchronous>, transform_indices = @transform_4, window_bounds = array<i64: 160, 128>}, {pipeline_mode = #tpu.pipeline_mode<synchronous>, transform_indices = @transform_5, window_bounds = array<i64: 1, 128>}, {pipeline_mode = #tpu.pipeline_mode<synchronous>, transform_indices = @transform_6, window_bounds = array<i64: 1, 128>}, {transform_indices = @transform_7, window_bounds = array<i64: 8, 1>}]} {
    %c0 = arith.constant 0 : index
    %c0_0 = arith.constant 0 : index
    %0 = vector.load %arg1[%c0, %c0_0] : memref<8x160xbf16, #tpu.memory_space<vmem>>, vector<8x160xbf16>
    %c0_1 = arith.constant 0 : index
    %c0_2 = arith.constant 0 : index
    %1 = vector.load %arg2[%c0_1, %c0_2] : memref<160x128xbf16, #tpu.memory_space<vmem>>, vector<160x128xbf16>
    %cst = arith.constant dense<0.000000e+00> : vector<8x128xf32>
    %2 = tpu.matmul %0, %1, %cst {dimension_numbers = #tpu.dot_dimension_numbers<[1], [0], [0], [1], [0, 0, 1, 1], [], []>} : vector<8x160xbf16>, vector<160x128xbf16>, vector<8x128xf32> -> vector<8x128xf32>
    %c0_3 = arith.constant 0 : index
    %c0_4 = arith.constant 0 : index
    %3 = vector.load %arg3[%c0_3, %c0_4] : memref<1x128xf32, #tpu.memory_space<vmem>>, vector<1x128xf32>
    %4 = vector.broadcast %3 : vector<1x128xf32> to vector<8x128xf32>
    %5 = arith.addf %2, %4 : vector<8x128xf32>
    %cst_5 = arith.constant 2.000000e-01 : f32
    %6 = vector.broadcast %cst_5 : f32 to vector<8x128xf32>
    %7 = arith.mulf %6, %5 : vector<8x128xf32>
    %8 = arith.maximumf %5, %7 : vector<8x128xf32>
    %9 = arith.truncf %8 : vector<8x128xf32> to vector<8x128xbf16>
    %c0_6 = arith.constant 0 : index
    %c0_7 = arith.constant 0 : index
    %10 = vector.load %arg4[%c0_6, %c0_7] : memref<128x128xbf16, #tpu.memory_space<vmem>>, vector<128x128xbf16>
    %cst_8 = arith.constant dense<0.000000e+00> : vector<8x128xf32>
    %11 = tpu.matmul %9, %10, %cst_8 {dimension_numbers = #tpu.dot_dimension_numbers<[1], [0], [0], [1], [0, 0, 1, 1], [], []>} : vector<8x128xbf16>, vector<128x128xbf16>, vector<8x128xf32> -> vector<8x128xf32>
    %c0_9 = arith.constant 0 : index
    %c0_10 = arith.constant 0 : index
    %12 = vector.load %arg5[%c0_9, %c0_10] : memref<160x128xbf16, #tpu.memory_space<vmem>>, vector<160x128xbf16>
    %cst_11 = arith.constant dense<0.000000e+00> : vector<8x128xf32>
    %13 = tpu.matmul %0, %12, %cst_11 {dimension_numbers = #tpu.dot_dimension_numbers<[1], [0], [0], [1], [0, 0, 1, 1], [], []>} : vector<8x160xbf16>, vector<160x128xbf16>, vector<8x128xf32> -> vector<8x128xf32>
    %14 = arith.addf %11, %13 : vector<8x128xf32>
    %c0_12 = arith.constant 0 : index
    %c0_13 = arith.constant 0 : index
    %15 = vector.load %arg6[%c0_12, %c0_13] : memref<1x128xf32, #tpu.memory_space<vmem>>, vector<1x128xf32>
    %16 = vector.broadcast %15 : vector<1x128xf32> to vector<8x128xf32>
    %17 = arith.addf %14, %16 : vector<8x128xf32>
    %cst_14 = arith.constant 2.000000e-01 : f32
    %18 = vector.broadcast %cst_14 : f32 to vector<8x128xf32>
    %19 = arith.mulf %18, %17 : vector<8x128xf32>
    %20 = arith.maximumf %17, %19 : vector<8x128xf32>
    %21 = arith.truncf %20 : vector<8x128xf32> to vector<8x128xbf16>
    %c0_15 = arith.constant 0 : index
    %c0_16 = arith.constant 0 : index
    %22 = vector.load %arg7[%c0_15, %c0_16] : memref<1x128xf32, #tpu.memory_space<vmem>>, vector<1x128xf32>
    %23 = arith.extf %21 : vector<8x128xbf16> to vector<8x128xf32>
    %24 = vector.broadcast %22 : vector<1x128xf32> to vector<8x128xf32>
    %25 = arith.mulf %23, %24 : vector<8x128xf32>
    %cst_17 = arith.constant dense<0.000000e+00> : vector<8xf32>
    %26 = vector.multi_reduction <add>, %25, %cst_17 [1] : vector<8x128xf32> to vector<8xf32>
    %27 = vector.shape_cast %26 : vector<8xf32> to vector<8x1xf32>
    %28 = vector.extract_strided_slice %17 {offsets = [0, 32], sizes = [8, 1], strides = [1, 1]} : vector<8x128xf32> to vector<8x1xf32>
    %29 = arith.addf %27, %28 : vector<8x1xf32>
    %30 = math.absf %29 : vector<8x1xf32>
    %cst_18 = arith.constant 0.000000e+00 : f32
    %31 = vector.broadcast %cst_18 : f32 to vector<8x1xf32>
    %32 = arith.subf %31, %30 : vector<8x1xf32>
    %33 = math.exp %32 : vector<8x1xf32>
    %cst_19 = arith.constant 0.000000e+00 : f32
    %34 = vector.broadcast %cst_19 : f32 to vector<8x1xf32>
    %35 = arith.cmpf oge, %29, %34 : vector<8x1xf32>
    %cst_20 = arith.constant 1.000000e+00 : f32
    %36 = vector.broadcast %cst_20 : f32 to vector<8x1xf32>
    %37 = arith.select %35, %36, %33 : vector<8x1xi1>, vector<8x1xf32>
    %cst_21 = arith.constant 1.000000e+00 : f32
    %38 = vector.broadcast %cst_21 : f32 to vector<8x1xf32>
    %39 = arith.addf %38, %33 : vector<8x1xf32>
    %40 = tpu.reciprocal %39 {approx = true} : vector<8x1xf32> -> vector<8x1xf32>
    %41 = arith.mulf %37, %40 : vector<8x1xf32>
    %cst_22 = arith.constant 0.000000e+00 : f32
    %cst_23 = arith.constant 1.000000e+00 : f32
    %42 = vector.broadcast %cst_22 : f32 to vector<8x1xf32>
    %43 = arith.maximumf %42, %41 : vector<8x1xf32>
    %44 = vector.broadcast %cst_23 : f32 to vector<8x1xf32>
    %45 = arith.minimumf %44, %43 : vector<8x1xf32>
    %c0_24 = arith.constant 0 : index
    %c0_25 = arith.constant 0 : index
    %46 = vector.load %arg8[%c0_24, %c0_25] : memref<8x1xf32, #tpu.memory_space<vmem>>, vector<8x1xf32>
    tpu.vector_store %arg8[%c0_24, %c0_25], %45 {strides = array<i32>} : memref<8x1xf32, #tpu.memory_space<vmem>>, vector<8x1xf32>,
    return
  }
  func.func @transform_0(%arg0: i32) -> (i32, i32) {
    %c0_i32 = arith.constant 0 : i32
    %c0_i32_0 = arith.constant 0 : i32
    return %arg0, %c0_i32 : i32, i32
  }
  func.func @transform_1(%arg0: i32) -> (i32, i32) {
    %c0_i32 = arith.constant 0 : i32
    %c0_i32_0 = arith.constant 0 : i32
    %c0_i32_1 = arith.constant 0 : i32
    return %c0_i32, %c0_i32_0 : i32, i32
  }
  func.func @transform_2(%arg0: i32) -> (i32, i32) {
    %c0_i32 = arith.constant 0 : i32
    %c0_i32_0 = arith.constant 0 : i32
    %c0_i32_1 = arith.constant 0 : i32
    return %c0_i32, %c0_i32_0 : i32, i32
  }
  func.func @transform_3(%arg0: i32) -> (i32, i32) {
    %c0_i32 = arith.constant 0 : i32
    %c0_i32_0 = arith.constant 0 : i32
    %c0_i32_1 = arith.constant 0 : i32
    return %c0_i32, %c0_i32_0 : i32, i32
  }
  func.func @transform_4(%arg0: i32) -> (i32, i32) {
    %c0_i32 = arith.constant 0 : i32
    %c0_i32_0 = arith.constant 0 : i32
    %c0_i32_1 = arith.constant 0 : i32
    return %c0_i32, %c0_i32_0 : i32, i32
  }
  func.func @transform_5(%arg0: i32) -> (i32, i32) {
    %c0_i32 = arith.constant 0 : i32
    %c0_i32_0 = arith.constant 0 : i32
    %c0_i32_1 = arith.constant 0 : i32
    return %c0_i32, %c0_i32_0 : i32, i32
  }
  func.func @transform_6(%arg0: i32) -> (i32, i32) {
    %c0_i32 = arith.constant 0 : i32
    %c0_i32_0 = arith.constant 0 : i32
    %c0_i32_1 = arith.constant 0 : i32
    return %c0_i32, %c0_i32_0 : i32, i32
  }
  func.func @transform_7(%arg0: i32) -> (i32, i32) {
    %c0_i32 = arith.constant 0 : i32
    %c0_i32_0 = arith.constant 0 : i32
    return %arg0, %c0_i32 : i32, i32
  }
}

</mosaic_0001>

<llo_original>
// kernel: discriminator_forward.1
$region0: #{discriminator_forward.1}
  #allocation0 [shape = 'u32[]', space=smem, size = 0x4, offset = 0x4, fixed_abs, tag = 'smem constant byte address 0x4 - core index']
  #allocation1 [shape = 'u32[144,128]{1,0:T(1,128)}', space=vmem, size = 0x12000, scoped, tag = 'internal scratch']
  %s0 = inlined_call_operand.vmem [shape: bf16[8,160], index: 0, kind: input, shape index: {}]
  %s1 = inlined_call_operand.hbm [shape: bf16[160,128], index: 1, kind: input, shape index: {}]
  %s2 = inlined_call_operand.vmem [shape: f32[1,128], index: 2, kind: input, shape index: {}]
  %s3 = inlined_call_operand.vmem [shape: bf16[128,128], index: 3, kind: input, shape index: {}]
  %s4 = inlined_call_operand.hbm [shape: bf16[160,128], index: 4, kind: input, shape index: {}]
  %s5 = inlined_call_operand.vmem [shape: f32[1,128], index: 5, kind: input, shape index: {}]
  %s6 = inlined_call_operand.vmem [shape: f32[1,128], index: 6, kind: input, shape index: {}]
  %s7 = inlined_call_operand.vmem [shape: f32[8,1], index: 7, kind: output, shape index: {}]
  %s8 = sld [smem:[#allocation0]]
  $region46: #{discriminator_forward.1} parent=0
    _
  %s10 = ssub.s32 1, %s8
  %s11 = scalar_select 0, %s10, %s8
  $region1: #{discriminator_forward.1} parent=0
    #allocation2 [shape = 'u8[40960]{0}', space=vmem, size = 0xa000, scoped, tag = 'input window, operand 1, single buffered']
    #allocation3 [shape = 's32[1]{0}', space=sflag, size = 0x4, scoped, tag = 'scoped memory for discriminator_forward.1']
    #allocation4 [shape = 'u8[40960]{0}', space=vmem, size = 0xa000, scoped, tag = 'input window, operand 4, single buffered']
    #allocation5 [shape = 's32[1]{0}', space=sflag, size = 0x4, scoped, tag = 'scoped memory for discriminator_forward.1']
    %12 = vsyncpa [#allocation3], 0
    %13 = vsyncpa [#allocation5], 0
    // Predicated region
    $region2: #{discriminator_forward.1} parent=1 // pred_check
      _
    $region3: #{discriminator_forward.1} parent=1 // pred_check_branch
      %15 = sbr.rel (0) target = $region5
    $region4: #{discriminator_forward.1} parent=1 // pred_region
      _
    $region5: #{discriminator_forward.1} parent=1 // pred_fallthru
      _
    // Predicated region
    $region6: #{discriminator_forward.1} parent=1 // pred_check
      _
    $region7: #{discriminator_forward.1} parent=1 // pred_check_branch
      %17 = sbr.rel (0) target = $region9
    $region8: #{discriminator_forward.1} parent=1 // pred_region
      %s19 = ssub.s32 1280, 1280
      %20 = vsyncadd [#allocation3], %s19
      %s21 = sshll.u32 [#allocation2], 4
      %s22 = int_to_ptr.vmem [resolvable:$true] %s21
      %27 = dma.hbm_to_vmem [thread:$0]  %s1, 1280, %s22, [#allocation3], 64, 64, 4
    $region9: #{discriminator_forward.1} parent=1 // pred_fallthru
      _
    // Predicated region
    $region10: #{discriminator_forward.1} parent=1 // pred_check
      _
    $region11: #{discriminator_forward.1} parent=1 // pred_check_branch
      %29 = sbr.rel (0) target = $region13
    $region12: #{discriminator_forward.1} parent=1 // pred_region
      _
    $region13: #{discriminator_forward.1} parent=1 // pred_fallthru
      _
    // Predicated region
    $region14: #{discriminator_forward.1} parent=1 // pred_check
      _
    $region15: #{discriminator_forward.1} parent=1 // pred_check_branch
      %31 = sbr.rel (0) target = $region17
    $region16: #{discriminator_forward.1} parent=1 // pred_region
      _
    $region17: #{discriminator_forward.1} parent=1 // pred_fallthru
      _
    // Predicated region
    $region18: #{discriminator_forward.1} parent=1 // pred_check
      _
    $region19: #{discriminator_forward.1} parent=1 // pred_check_branch
      %33 = sbr.rel (0) target = $region21
    $region20: #{discriminator_forward.1} parent=1 // pred_region
      %s35 = ssub.s32 1280, 1280
      %36 = vsyncadd [#allocation5], %s35
      %s37 = sshll.u32 [#allocation4], 4
      %s38 = int_to_ptr.vmem [resolvable:$true] %s37
      %43 = dma.hbm_to_vmem [thread:$0]  %s4, 1280, %s38, [#allocation5], 64, 64, 4
    $region21: #{discriminator_forward.1} parent=1 // pred_fallthru
      _
    // Predicated region
    $region22: #{discriminator_forward.1} parent=1 // pred_check
      _
    $region23: #{discriminator_forward.1} parent=1 // pred_check_branch
      %45 = sbr.rel (0) target = $region25
    $region24: #{discriminator_forward.1} parent=1 // pred_region
      _
    $region25: #{discriminator_forward.1} parent=1 // pred_fallthru
      _
    // Predicated region
    $region26: #{discriminator_forward.1} parent=1 // pred_check
      _
    $region27: #{discriminator_forward.1} parent=1 // pred_check_branch
      %47 = sbr.rel (0) target = $region29
    $region28: #{discriminator_forward.1} parent=1 // pred_region
      _
    $region29: #{discriminator_forward.1} parent=1 // pred_fallthru
      _
    // Predicated region
    $region30: #{discriminator_forward.1} parent=1 // pred_check
      _
    $region31: #{discriminator_forward.1} parent=1 // pred_check_branch
      %49 = sbr.rel (0) target = $region33
    $region32: #{discriminator_forward.1} parent=1 // pred_region
      %50 = dma.done [#allocation3], 1280
    $region33: #{discriminator_forward.1} parent=1 // pred_fallthru
      _
    // Predicated region
    $region34: #{discriminator_forward.1} parent=1 // pred_check
      _
    $region35: #{discriminator_forward.1} parent=1 // pred_check_branch
      %52 = sbr.rel (0) target = $region37
    $region36: #{discriminator_forward.1} parent=1 // pred_region
      %53 = dma.done [#allocation5], 1280
    $region37: #{discriminator_forward.1} parent=1 // pred_fallthru
      _
    %v55 = vld [vmem:[%s0] sm:$0xff]
    %v56 = vld [vmem:[#allocation2] sm:$0xf]
    %v57 = vld [vmem:[#allocation2 + $0x4] sm:$0xf]
    %v58 = vld [vmem:[#allocation2 + $0x8] sm:$0xf]
    %v59 = vld [vmem:[#allocation2 + $0xc] sm:$0xf]
    %v60 = vld [vmem:[#allocation2 + $0x10] sm:$0xf]
    %v61 = vld [vmem:[#allocation2 + $0x14] sm:$0xf]
    %v62 = vld [vmem:[#allocation2 + $0x18] sm:$0xf]
    %v63 = vld [vmem:[#allocation2 + $0x1c] sm:$0xf]
    %v64 = vld [vmem:[#allocation2 + $0x20] sm:$0xf]
    %v65 = vld [vmem:[#allocation2 + $0x24] sm:$0xf]
    %v66 = vld [vmem:[#allocation2 + $0x28] sm:$0xf]
    %v67 = vld [vmem:[#allocation2 + $0x2c] sm:$0xf]
    %v68 = vld [vmem:[#allocation2 + $0x30] sm:$0xf]
    %v69 = vld [vmem:[#allocation2 + $0x34] sm:$0xf]
    %v70 = vld [vmem:[#allocation2 + $0x38] sm:$0xf]
    %v71 = vld [vmem:[#allocation2 + $0x3c] sm:$0xf]
    %v72 = vld [vmem:[#allocation2 + $0x40] sm:$0xf]
    %v73 = vld [vmem:[#allocation2 + $0x44] sm:$0xf]
    %v74 = vld [vmem:[#allocation2 + $0x48] sm:$0xf]
    %v75 = vld [vmem:[#allocation2 + $0x4c] sm:$0xf]
    %v76 = vld [vmem:[%s2] sm:$0x1]
    %v78 = vlaneseq
    %v79 = vshrl.u32 %v78, 7
    %v80 = vsub.s32 0, %v79
    %v81 = vrot.slane %v76, %v80
    %v84 = vunpack.c.l.b16 %v55
    %v85 = vunpack.c.h.b16 %v55
    %v86 = vpack.c.b16 %v84, %v84
    %v87 = vpack.c.b16 %v85, %v85
    %v109 = vunpack.c.l.b16 %v56
    %v110 = vunpack.c.l.b16 %v57
    %v111 = vunpack.c.l.b16 %v58
    %v112 = vunpack.c.l.b16 %v59
    %v113 = vunpack.c.l.b16 %v60
    %v114 = vunpack.c.l.b16 %v61
    %v115 = vunpack.c.l.b16 %v62
    %v116 = vunpack.c.l.b16 %v63
    %v117 = vunpack.c.l.b16 %v64
    %v118 = vunpack.c.l.b16 %v65
    %v119 = vunpack.c.l.b16 %v66
    %v120 = vunpack.c.l.b16 %v67
    %v121 = vunpack.c.l.b16 %v68
    %v122 = vunpack.c.l.b16 %v69
    %v123 = vunpack.c.l.b16 %v70
    %v124 = vunpack.c.l.b16 %v71
    %v125 = vunpack.c.l.b16 %v72
    %v126 = vunpack.c.l.b16 %v73
    %v127 = vunpack.c.l.b16 %v74
    %v128 = vunpack.c.l.b16 %v75
    %v129 = vpack.c.b16 %v110, %v109
    %v130 = vpack.c.b16 %v112, %v111
    %v131 = vpack.c.b16 %v114, %v113
    %v132 = vpack.c.b16 %v116, %v115
    %v133 = vpack.c.b16 %v118, %v117
    %v134 = vpack.c.b16 %v120, %v119
    %v135 = vpack.c.b16 %v122, %v121
    %v136 = vpack.c.b16 %v124, %v123
    %v137 = vpack.c.b16 %v126, %v125
    %v138 = vpack.c.b16 %v128, %v127
    %vm149 = vcmask 261120
    %v151 = vsel %vm149, %v87, 0
    %153 = vmatprep.subr.bf16.mxu0 0
    %154 = vmatpush1.bf16.msra.mxu0 %v136
    %155 = vmatprep.subr.bf16.mxu0 0
    %156 = vmatpush1.bf16.msra.mxu0 %v135
    %157 = vmatprep.subr.bf16.mxu0 0
    %158 = vmatpush1.bf16.msra.mxu0 %v134
    %159 = vmatprep.subr.bf16.mxu0 0
    %160 = vmatpush1.bf16.msra.mxu0 %v133
    %161 = vmatprep.subr.bf16.mxu0 0
    %162 = vmatpush1.bf16.msra.mxu0 %v132
    %163 = vmatprep.subr.bf16.mxu0 0
    %164 = vmatpush1.bf16.msra.mxu0 %v131
    %165 = vmatprep.subr.bf16.mxu0 0
    %166 = vmatpush1.bf16.msra.mxu0 %v130
    %167 = vmatprep.subr.bf16.mxu0 0
    %168 = vmatpush1.bf16.msra.mxu0 %v129
    %169 = vmatprep.subr.bf16.mxu0 0
    %170 = vmatpush2.bf16.msra.mxu0 0
    %171 = vmatprep.subr.bf16.mxu0 0
    %172 = vmatpush2.bf16.msra.mxu0 0
    %173 = vmatprep.subr.bf16.mxu0 0
    %174 = vmatpush2.bf16.msra.mxu0 0
    %175 = vmatprep.subr.bf16.mxu0 0
    %176 = vmatpush2.bf16.msra.mxu0 0
    %177 = vmatprep.subr.bf16.mxu0 0
    %178 = vmatpush2.bf16.msra.mxu0 0
    %179 = vmatprep.subr.bf16.mxu0 0
    %180 = vmatpush2.bf16.msra.mxu0 0
    %181 = vmatprep.subr.bf16.mxu0 0
    %182 = vmatpush2.bf16.msra.mxu0 %v138
    %183 = vmatprep.subr.bf16.mxu0 0
    %184 = vmatpush2.bf16.msra.mxu0 %v137
    %185 = vmatprep.mubr.bf16.mxu0 %v151
    %186 = vmatmul.mubr.bf16.gmra.mxu0 %v86
    %v187 = vpop.f32.mrf.mxu0
    %v188 = vadd.f32 %v81, %v187
    %v189 = vpop.f32.mrf.mxu0
    %v190 = vpop.f32.mrf.mxu0
    %v191 = vpop.f32.mrf.mxu0
    %192 = vdwg.mxu0
    %v193 = vmul.f32 %v188, 0.2
    %v194 = vmax.f32 %v188, %v193
    %v195 = vpack.c.bf16 %v194, %v194
    %v196 = vld [vmem:[%s3] sm:$0xf]
    %v197 = vld [vmem:[%s3 + $0x4] sm:$0xf]
    %v198 = vld [vmem:[%s3 + $0x8] sm:$0xf]
    %v199 = vld [vmem:[%s3 + $0xc] sm:$0xf]
    %v200 = vld [vmem:[%s3 + $0x10] sm:$0xf]
    %v201 = vld [vmem:[%s3 + $0x14] sm:$0xf]
    %v202 = vld [vmem:[%s3 + $0x18] sm:$0xf]
    %v203 = vld [vmem:[%s3 + $0x1c] sm:$0xf]
    %v204 = vld [vmem:[%s3 + $0x20] sm:$0xf]
    %v205 = vld [vmem:[%s3 + $0x24] sm:$0xf]
    %v206 = vld [vmem:[%s3 + $0x28] sm:$0xf]
    %v207 = vld [vmem:[%s3 + $0x2c] sm:$0xf]
    %v208 = vld [vmem:[%s3 + $0x30] sm:$0xf]
    %v209 = vld [vmem:[%s3 + $0x34] sm:$0xf]
    %v210 = vld [vmem:[%s3 + $0x38] sm:$0xf]
    %v211 = vld [vmem:[%s3 + $0x3c] sm:$0xf]
    %v212 = vld [vmem:[#allocation4] sm:$0xf]
    %v213 = vld [vmem:[#allocation4 + $0x4] sm:$0xf]
    %v214 = vld [vmem:[#allocation4 + $0x8] sm:$0xf]
    %v215 = vld [vmem:[#allocation4 + $0xc] sm:$0xf]
    %v216 = vld [vmem:[#allocation4 + $0x10] sm:$0xf]
    %v217 = vld [vmem:[#allocation4 + $0x14] sm:$0xf]
    %v218 = vld [vmem:[#allocation4 + $0x18] sm:$0xf]
    %v219 = vld [vmem:[#allocation4 + $0x1c] sm:$0xf]
    %v220 = vld [vmem:[#allocation4 + $0x20] sm:$0xf]
    %v221 = vld [vmem:[#allocation4 + $0x24] sm:$0xf]
    %v222 = vld [vmem:[#allocation4 + $0x28] sm:$0xf]
    %v223 = vld [vmem:[#allocation4 + $0x2c] sm:$0xf]
    %v224 = vld [vmem:[#allocation4 + $0x30] sm:$0xf]
    %v225 = vld [vmem:[#allocation4 + $0x34] sm:$0xf]
    %v226 = vld [vmem:[#allocation4 + $0x38] sm:$0xf]
    %v227 = vld [vmem:[#allocation4 + $0x3c] sm:$0xf]
    %v228 = vld [vmem:[#allocation4 + $0x40] sm:$0xf]
    %v229 = vld [vmem:[#allocation4 + $0x44] sm:$0xf]
    %v230 = vld [vmem:[#allocation4 + $0x48] sm:$0xf]
    %v231 = vld [vmem:[#allocation4 + $0x4c] sm:$0xf]
    %v252 = vunpack.c.l.b16 %v212
    %v253 = vunpack.c.l.b16 %v213
    %v254 = vunpack.c.l.b16 %v214
    %v255 = vunpack.c.l.b16 %v215
    %v256 = vunpack.c.l.b16 %v216
    %v257 = vunpack.c.l.b16 %v217
    %v258 = vunpack.c.l.b16 %v218
    %v259 = vunpack.c.l.b16 %v219
    %v260 = vunpack.c.l.b16 %v220
    %v261 = vunpack.c.l.b16 %v221
    %v262 = vunpack.c.l.b16 %v222
    %v263 = vunpack.c.l.b16 %v223
    %v264 = vunpack.c.l.b16 %v224
    %v265 = vunpack.c.l.b16 %v225
    %v266 = vunpack.c.l.b16 %v226
    %v267 = vunpack.c.l.b16 %v227
    %v268 = vunpack.c.l.b16 %v228
    %v269 = vunpack.c.l.b16 %v229
    %v270 = vunpack.c.l.b16 %v230
    %v271 = vunpack.c.l.b16 %v231
    %v272 = vpack.c.b16 %v253, %v252
    %v273 = vpack.c.b16 %v255, %v254
    %v274 = vpack.c.b16 %v257, %v256
    %v275 = vpack.c.b16 %v259, %v258
    %v276 = vpack.c.b16 %v261, %v260
    %v277 = vpack.c.b16 %v263, %v262
    %v278 = vpack.c.b16 %v265, %v264
    %v279 = vpack.c.b16 %v267, %v266
    %v280 = vpack.c.b16 %v269, %v268
    %v281 = vpack.c.b16 %v271, %v270
    %292 = vmatprep.subr.bf16.mxu0 0
    %293 = vmatpush1.bf16.msra.mxu0 %v279
    %294 = vmatprep.subr.bf16.mxu0 0
    %295 = vmatpush1.bf16.msra.mxu0 %v278
    %296 = vmatprep.subr.bf16.mxu0 0
    %297 = vmatpush1.bf16.msra.mxu0 %v277
    %298 = vmatprep.subr.bf16.mxu0 0
    %299 = vmatpush1.bf16.msra.mxu0 %v276
    %300 = vmatprep.subr.bf16.mxu0 0
    %301 = vmatpush1.bf16.msra.mxu0 %v275
    %302 = vmatprep.subr.bf16.mxu0 0
    %303 = vmatpush1.bf16.msra.mxu0 %v274
    %304 = vmatprep.subr.bf16.mxu0 0
    %305 = vmatpush1.bf16.msra.mxu0 %v273
    %306 = vmatprep.subr.bf16.mxu0 0
    %307 = vmatpush1.bf16.msra.mxu0 %v272
    %308 = vmatprep.subr.bf16.mxu0 0
    %309 = vmatpush2.bf16.msra.mxu0 0
    %310 = vmatprep.subr.bf16.mxu0 0
    %311 = vmatpush2.bf16.msra.mxu0 0
    %312 = vmatprep.subr.bf16.mxu0 0
    %313 = vmatpush2.bf16.msra.mxu0 0
    %314 = vmatprep.subr.bf16.mxu0 0
    %315 = vmatpush2.bf16.msra.mxu0 0
    %316 = vmatprep.subr.bf16.mxu0 0
    %317 = vmatpush2.bf16.msra.mxu0 0
    %318 = vmatprep.subr.bf16.mxu0 0
    %319 = vmatpush2.bf16.msra.mxu0 0
    %320 = vmatprep.subr.bf16.mxu0 0
    %321 = vmatpush2.bf16.msra.mxu0 %v281
    %322 = vmatprep.subr.bf16.mxu0 0
    %323 = vmatpush2.bf16.msra.mxu0 %v280
    %324 = vmatprep.mubr.bf16.mxu0 %v151
    %325 = vmatmul.mubr.bf16.gmra.mxu0 %v86
    %v326 = vpop.f32.mrf.mxu0
    %v327 = vadd.f32 0.0, %v326
    %v328 = vpop.f32.mrf.mxu0
    %v329 = vpop.f32.mrf.mxu0
    %v330 = vpop.f32.mrf.mxu0
    %331 = vdwg.mxu0
    %v348 = vunpack.c.l.b16 %v196
    %v349 = vunpack.c.l.b16 %v197
    %v350 = vunpack.c.l.b16 %v198
    %v351 = vunpack.c.l.b16 %v199
    %v352 = vunpack.c.l.b16 %v200
    %v353 = vunpack.c.l.b16 %v201
    %v354 = vunpack.c.l.b16 %v202
    %v355 = vunpack.c.l.b16 %v203
    %v356 = vunpack.c.l.b16 %v204
    %v357 = vunpack.c.l.b16 %v205
    %v358 = vunpack.c.l.b16 %v206
    %v359 = vunpack.c.l.b16 %v207
    %v360 = vunpack.c.l.b16 %v208
    %v361 = vunpack.c.l.b16 %v209
    %v362 = vunpack.c.l.b16 %v210
    %v363 = vunpack.c.l.b16 %v211
    %v364 = vpack.c.b16 %v349, %v348
    %v365 = vpack.c.b16 %v351, %v350
    %v366 = vpack.c.b16 %v353, %v352
    %v367 = vpack.c.b16 %v355, %v354
    %v368 = vpack.c.b16 %v357, %v356
    %v369 = vpack.c.b16 %v359, %v358
    %v370 = vpack.c.b16 %v361, %v360
    %v371 = vpack.c.b16 %v363, %v362
    %380 = vmatprep.subr.bf16.mxu0 0
    %381 = vmatpush1.bf16.msra.mxu0 %v371
    %382 = vmatprep.subr.bf16.mxu0 0
    %383 = vmatpush1.bf16.msra.mxu0 %v370
    %384 = vmatprep.subr.bf16.mxu0 0
    %385 = vmatpush1.bf16.msra.mxu0 %v369
    %386 = vmatprep.subr.bf16.mxu0 0
    %387 = vmatpush1.bf16.msra.mxu0 %v368
    %388 = vmatprep.subr.bf16.mxu0 0
    %389 = vmatpush1.bf16.msra.mxu0 %v367
    %390 = vmatprep.subr.bf16.mxu0 0
    %391 = vmatpush1.bf16.msra.mxu0 %v366
    %392 = vmatprep.subr.bf16.mxu0 0
    %393 = vmatpush1.bf16.msra.mxu0 %v365
    %394 = vmatprep.subr.bf16.mxu0 0
    %395 = vmatpush1.bf16.msra.mxu0 %v364
    %396 = vmatprep.subr.bf16.mxu0 0
    %397 = vmatpush2.bf16.msra.mxu0 0
    %398 = vmatprep.subr.bf16.mxu0 0
    %399 = vmatpush2.bf16.msra.mxu0 0
    %400 = vmatprep.subr.bf16.mxu0 0
    %401 = vmatpush2.bf16.msra.mxu0 0
    %402 = vmatprep.subr.bf16.mxu0 0
    %403 = vmatpush2.bf16.msra.mxu0 0
    %404 = vmatprep.subr.bf16.mxu0 0
    %405 = vmatpush2.bf16.msra.mxu0 0
    %406 = vmatprep.subr.bf16.mxu0 0
    %407 = vmatpush2.bf16.msra.mxu0 0
    %408 = vmatprep.subr.bf16.mxu0 0
    %409 = vmatpush2.bf16.msra.mxu0 0
    %410 = vmatprep.subr.bf16.mxu0 0
    %411 = vmatpush2.bf16.msra.mxu0 0
    %412 = vmatprep.mubr.bf16.mxu0 0
    %413 = vmatmul.mubr.bf16.gmra.mxu0 %v195
    %v414 = vpop.f32.mrf.mxu0
    %v415 = vadd.f32 %v327, %v414
    %v416 = vpop.f32.mrf.mxu0
    %v417 = vpop.f32.mrf.mxu0
    %v418 = vpop.f32.mrf.mxu0
    %419 = vdwg.mxu0
    %v420 = vld [vmem:[%s5] sm:$0x1]
    %v422 = vlaneseq
    %v423 = vshrl.u32 %v422, 7
    %v424 = vsub.s32 0, %v423
    %v425 = vrot.slane %v420, %v424
    %v427 = vadd.f32 %v415, %v425
    %v428 = vmul.f32 %v427, 0.2
    %v429 = vmax.f32 %v427, %v428
    %v430 = vpack.c.bf16 %v429, %v429
    %v431 = vld [vmem:[%s6] sm:$0x1]
    %v432 = vunpack.c.l.bf16 %v430
    %v434 = vlaneseq
    %v435 = vshrl.u32 %v434, 7
    %v436 = vsub.s32 0, %v435
    %v437 = vrot.slane %v431, %v436
    %v439 = vmul.f32 %v432, %v437
    %440 = vadd.xlane.f32.xlu0 %v439
    %v441 = vpop.xlane.xlu0 %440
    %v442 = vadd.f32 %v441, %v427
    %v443 = vand.u32 2147483647, %v442
    %v444 = vsub.f32 0.0, %v443
    %v445 = vmul.f32 %v444, 1.442695
    %v446 = vpow.pop %v445
    %vm447 = vcmp.ge.f32.partialorder %v442, 0.0
    %v448 = vsel %vm447, 1.0, %v446
    %v449 = vadd.f32 %v446, 1.0
    %v450 = vrcp.pop %v449
    %v451 = vmul.f32 %v448, %v450
    %v452 = vmax.f32 %v451, 0.0
    %v453 = vmin.f32 %v452, 1.0
    %455 = vrot.lane.b32.xlu0 %v453, 96
    %v456 = vpop.permute.xlu0 %455
    %vm458 = vcmask 7168
    %459 = vst.msk [vmem:[%s7] sm:$0xff] %vm458, %v456
    // Predicated region
    $region38: #{discriminator_forward.1} parent=1 // pred_check
      _
    $region39: #{discriminator_forward.1} parent=1 // pred_check_branch
      %461 = sbr.rel (0) target = $region41
    $region40: #{discriminator_forward.1} parent=1 // pred_region
      _
    $region41: #{discriminator_forward.1} parent=1 // pred_fallthru
      _
    // Predicated region
    $region42: #{discriminator_forward.1} parent=1 // pred_check
      _
    $region43: #{discriminator_forward.1} parent=1 // pred_check_branch
      %463 = sbr.rel (0) target = $region45
    $region44: #{discriminator_forward.1} parent=1 // pred_region
      _
    $region45: #{discriminator_forward.1} parent=1 // pred_fallthru
      _
    %464 = vsyncpa [#allocation3], 1
    %465 = vsyncpa [#allocation5], 1

</llo_original>
